<compile_context>
chip_gen: v7x
topology: tpu7x:2x2x1
jax: 0.10.0
libtpu: 0.0.40
codegen_flags: <defaults>
</compile_context>

<pallas_src>
import jax
import jax.numpy as jnp
from jax.experimental import pallas as pl
from jax.experimental.pallas import tpu as pltpu


def _round_up(x: int, m: int) -> int:
    return ((x + m - 1) // m) * m


def _vmem_budget_bytes() -> int:
    """Per-generation scoped-VMEM budget (leave headroom for compiler scratch)."""
    try:
        kind = jax.devices()[0].device_kind.lower()
    except Exception:  # pragma: no cover - defensive only
        kind = ""
    if "v7" in kind:
        return 44 * 1024 * 1024      # 64 MiB physical per TC on v7x
    return 96 * 1024 * 1024          # 128 MiB physical on v5e / v6e


def _pipeline_footprint(Bp: int, Fp: int, tn: int, w_bufs: int) -> int:
    """Bytes of VMEM used by the pipelined linear kernel for a given tile."""
    return (Bp * Fp * 2              # resident bf16 activations
            + w_bufs * Fp * tn * 2   # bf16 weight tiles (pipelined)
            + 2 * Bp * tn * 4        # f32 output tiles (double-buffered)
            + 2 * tn * 4)            # f32 bias tiles


def _pick_vocab_tile(Bp: int, Fp: int, Vp: int, budget: int) -> int:
    """Largest tn (multiple of 128, exact divisor of Vp) whose footprint fits."""
    for tn in range(Vp, 127, -128):
        if Vp % tn == 0 and _pipeline_footprint(Bp, Fp, tn, 2) <= budget:
            return tn
    return 128


def _linear_kernel(x_ref, w_ref, b_ref, o_ref):
    # x: (Bp, Fp) bf16   w: (Fp, tn) bf16   b: (1, tn) f32   ->  o: (Bp, tn) f32
    acc = jnp.dot(x_ref[...], w_ref[...], preferred_element_type=jnp.float32)
    o_ref[...] = acc + b_ref[...]


def build_forward(emb_table, w, b, *, max_batch=8):
    """Pre-pad / pre-cast the linear layer once and return a jitted forward.

    emb_table : (V, E) f32 embedding weights
    w         : (T*E, V) f32 linear weight (transpose of PyTorch's (V, T*E))
    b         : (V,)    f32 linear bias
    max_batch : largest batch the returned forward will be called with
    returns   : forward(idx: (B, T) int32) -> (B, V) f32 logits
    """
    _, E = emb_table.shape
    F, V = w.shape

    Bp = _round_up(max(max_batch, 8), 8)   # sublane multiple
    Fp = _round_up(F, 128)                 # lane-dense contraction dim
    Vp = _round_up(V, 128)                 # lane-dense output dim

    budget = _vmem_budget_bytes()
    tn = _pick_vocab_tile(Bp, Fp, Vp, budget)
    n_tiles = Vp // tn

    # 3rd weight buffer keeps the DMA stream busy (mostly helps v7x) when there
    # are enough tiles and it still fits the budget; otherwise plain double-buffer.
    use_three = n_tiles >= 4 and _pipeline_footprint(Bp, Fp, tn, 3) <= budget
    w_bufs = 3 if use_three else 2
    vmem_limit = min(budget,
                     max(int(_pipeline_footprint(Bp, Fp, tn, w_bufs) * 1.5),
                         32 * 1024 * 1024))

    # ---- One-time pad + cast of the parameters (hoisted off the call path) --
    w_p = jnp.pad(w, ((0, Fp - F), (0, Vp - V))).astype(jnp.bfloat16)
    b_p = jnp.pad(b.astype(jnp.float32).reshape(1, V), ((0, 0), (0, Vp - V)))
    emb = emb_table.astype(jnp.float32)

    cost = pl.CostEstimate(
        flops=2 * Bp * Fp * Vp,
        transcendentals=0,
        bytes_accessed=(Bp * Fp * 2) + (Fp * Vp * 2) + (Vp * 4) + (Bp * Vp * 4),
    )

    if use_three:
        weight_spec = pl.BlockSpec((Fp, tn), lambda j: (0, j),
                                   pipeline_mode=pl.Buffered(3))
    else:
        weight_spec = pl.BlockSpec((Fp, tn), lambda j: (0, j))

    linear = pl.pallas_call(
        _linear_kernel,
        out_shape=jax.ShapeDtypeStruct((Bp, Vp), jnp.float32),
        grid=(n_tiles,),
        in_specs=[
            pl.BlockSpec((Bp, Fp), lambda j: (0, 0)),   # activations (resident)
            weight_spec,                                # weight tile (streamed)
            pl.BlockSpec((1, tn), lambda j: (0, j)),    # bias tile
        ],
        out_specs=pl.BlockSpec((Bp, tn), lambda j: (0, j)),
        compiler_params=pltpu.CompilerParams(
            dimension_semantics=("parallel",),
            vmem_limit_bytes=vmem_limit,
        ),
        cost_estimate=cost,
    )

    @jax.jit
    def _forward(idx, emb_, w_p_, b_p_):
        B, T = idx.shape
        f = T * E
        # Embedding lookup + flatten (pure indexing glue, plain JAX).
        x = jnp.take(emb_, idx, axis=0).reshape(B, f)               # (B, F) f32
        # Only the tiny activation slab is padded / cast per call.
        x_p = jnp.pad(x, ((0, Bp - B), (0, Fp - f))).astype(jnp.bfloat16)
        logits_p = linear(x_p, w_p_, b_p_)
        return logits_p[:B, :V]

    def forward(idx):
        assert idx.shape[0] <= Bp, "batch exceeds max_batch used at build time"
        assert idx.shape[1] * E == F, "idx sequence length inconsistent with w"
        return _forward(idx, emb, w_p, b_p)

    return forward


if __name__ == "__main__":
    # Small, deterministic configuration consistent with the module:
    # char-level vocab of 65, block_size = 8, n_embd = 32, batch = 2.
    vocab_size = 65
    n_embd = 32
    block_size = 8
    batch = 2
    fan_in = n_embd * block_size

    key = jax.random.PRNGKey(0)
    k_emb, k_w, k_b, k_idx = jax.random.split(key, 4)

    # nn.Embedding default init: N(0, 1)
    emb_table = jax.random.normal(k_emb, (vocab_size, n_embd), jnp.float32)

    # nn.Linear default init: U(-1/sqrt(fan_in), 1/sqrt(fan_in))
    bound = 1.0 / (fan_in ** 0.5)
    w_pt = jax.random.uniform(
        k_w, (vocab_size, fan_in), jnp.float32, minval=-bound, maxval=bound
    )
    b_pt = jax.random.uniform(
        k_b, (vocab_size,), jnp.float32, minval=-bound, maxval=bound
    )
    w = w_pt.T                                 # (fan_in, vocab) for x @ w
    b = b_pt                                   # (vocab,)

    idx = jax.random.randint(
        k_idx, (batch, block_size), 0, vocab_size, dtype=jnp.int32
    )

    forward = build_forward(emb_table, w, b, max_batch=batch)
    logits = jax.block_until_ready(forward(idx))
    assert logits.shape == (batch, vocab_size), logits.shape

    # Reference 1: same bf16 input rounding, f32 accumulation (tight tolerance).
    x_ref = jnp.take(emb_table, idx, axis=0).reshape(batch, -1)
    x_bf = x_ref.astype(jnp.bfloat16).astype(jnp.float32)
    w_bf = w.astype(jnp.bfloat16).astype(jnp.float32)
    ref_bf16 = x_bf @ w_bf + b_pt[None, :]
    assert jnp.allclose(logits, ref_bf16, atol=1e-3, rtol=1e-3)

    # Reference 2: full-f32 math (loose tolerance covers the bf16 cast).
    ref_f32 = x_ref @ w + b_pt[None, :]
    assert jnp.allclose(logits, ref_f32, atol=5e-2, rtol=0.0)

    print("KERNEL_OK")
</pallas_src>

<mosaic_0001>
module attributes {stable_mosaic.version = 11 : i64} {
  func.func @_linear_kernel(%arg0: i32, %arg1: memref<8x256xbf16, #tpu.memory_space<vmem>>, %arg2: memref<256x128xbf16, #tpu.memory_space<vmem>>, %arg3: memref<1x128xf32, #tpu.memory_space<vmem>>, %arg4: memref<8x128xf32, #tpu.memory_space<vmem>>) attributes {dimension_semantics = [#tpu.dimension_semantics<parallel>], iteration_bounds = array<i64: 1>, scalar_prefetch = 0 : i64, scratch_operands = 0 : i64, tpu.core_type = #tpu.core_type<tc>, window_params = [{pipeline_mode = #tpu.pipeline_mode<synchronous>, transform_indices = @transform_0, window_bounds = array<i64: 8, 256>}, {transform_indices = @transform_1, window_bounds = array<i64: 256, 128>}, {transform_indices = @transform_2, window_bounds = array<i64: 1, 128>}, {transform_indices = @transform_3, window_bounds = array<i64: 8, 128>}]} {
    %c0 = arith.constant 0 : index
    %c0_0 = arith.constant 0 : index
    %0 = vector.load %arg1[%c0, %c0_0] : memref<8x256xbf16, #tpu.memory_space<vmem>>, vector<8x256xbf16>
    %c0_1 = arith.constant 0 : index
    %c0_2 = arith.constant 0 : index
    %1 = vector.load %arg2[%c0_1, %c0_2] : memref<256x128xbf16, #tpu.memory_space<vmem>>, vector<256x128xbf16>
    %cst = arith.constant dense<0.000000e+00> : vector<8x128xf32>
    %2 = tpu.matmul %0, %1, %cst {dimension_numbers = #tpu.dot_dimension_numbers<[1], [0], [0], [1], [0, 0, 1, 1], [], []>} : vector<8x256xbf16>, vector<256x128xbf16>, vector<8x128xf32> -> vector<8x128xf32>
    %c0_3 = arith.constant 0 : index
    %c0_4 = arith.constant 0 : index
    %3 = vector.load %arg3[%c0_3, %c0_4] : memref<1x128xf32, #tpu.memory_space<vmem>>, vector<1x128xf32>
    %4 = vector.broadcast %3 : vector<1x128xf32> to vector<8x128xf32>
    %5 = arith.addf %2, %4 : vector<8x128xf32>
    %c0_5 = arith.constant 0 : index
    %c0_6 = arith.constant 0 : index
    %6 = vector.load %arg4[%c0_5, %c0_6] : memref<8x128xf32, #tpu.memory_space<vmem>>, vector<8x128xf32>
    tpu.vector_store %arg4[%c0_5, %c0_6], %5 {strides = array<i32>} : memref<8x128xf32, #tpu.memory_space<vmem>>, vector<8x128xf32>,
    return
  }
  func.func @transform_0(%arg0: i32) -> (i32, i32) {
    %c0_i32 = arith.constant 0 : i32
    %c0_i32_0 = arith.constant 0 : i32
    %c0_i32_1 = arith.constant 0 : i32
    return %c0_i32, %c0_i32_0 : i32, i32
  }
  func.func @transform_1(%arg0: i32) -> (i32, i32) {
    %c0_i32 = arith.constant 0 : i32
    %c0_i32_0 = arith.constant 0 : i32
    return %c0_i32, %arg0 : i32, i32
  }
  func.func @transform_2(%arg0: i32) -> (i32, i32) {
    %c0_i32 = arith.constant 0 : i32
    %c0_i32_0 = arith.constant 0 : i32
    return %c0_i32, %arg0 : i32, i32
  }
  func.func @transform_3(%arg0: i32) -> (i32, i32) {
    %c0_i32 = arith.constant 0 : i32
    %c0_i32_0 = arith.constant 0 : i32
    return %c0_i32, %arg0 : i32, i32
  }
}

</mosaic_0001>

<llo_original>
// kernel: _forward.1
$region0: #{_forward.1}
  #allocation0 [shape = 'u32[]', space=smem, size = 0x4, offset = 0x4, fixed_abs, tag = 'smem constant byte address 0x4 - core index']
  #allocation1 [shape = 'u32[144,128]{1,0:T(1,128)}', space=vmem, size = 0x12000, scoped, tag = 'internal scratch']
  %s0 = inlined_call_operand.vmem [shape: bf16[8,256], index: 0, kind: input, shape index: {}]
  %s1 = inlined_call_operand.vmem [shape: bf16[256,128], index: 1, kind: input, shape index: {}]
  %s2 = inlined_call_operand.vmem [shape: f32[1,128], index: 2, kind: input, shape index: {}]
  %s3 = inlined_call_operand.vmem [shape: f32[8,128], index: 3, kind: output, shape index: {}]
  %s4 = sld [smem:[#allocation0]]
  $region22: #{_forward.1} parent=0
    _
  %s6 = ssub.s32 1, %s4
  %s7 = scalar_select 0, %s6, %s4
  // Predicated region
  $region2: #{_forward.1} parent=0 // pred_check
    _
  $region3: #{_forward.1} parent=0 // pred_check_branch
    %9 = sbr.rel (0) target = $region5
  $region4: #{_forward.1} parent=0 // pred_region
    _
  $region5: #{_forward.1} parent=0 // pred_fallthru
    _
  // Predicated region
  $region6: #{_forward.1} parent=0 // pred_check
    _
  $region7: #{_forward.1} parent=0 // pred_check_branch
    %11 = sbr.rel (0) target = $region9
  $region8: #{_forward.1} parent=0 // pred_region
    _
  $region9: #{_forward.1} parent=0 // pred_fallthru
    _
  // Predicated region
  $region10: #{_forward.1} parent=0 // pred_check
    _
  $region11: #{_forward.1} parent=0 // pred_check_branch
    %13 = sbr.rel (0) target = $region13
  $region12: #{_forward.1} parent=0 // pred_region
    _
  $region13: #{_forward.1} parent=0 // pred_fallthru
    _
  %v15 = vld [vmem:[%s0] sm:$0xff]
  %v16 = vld [vmem:[%s1] sm:$0xf]
  %v17 = vld [vmem:[%s1 + $0x4] sm:$0xf]
  %v18 = vld [vmem:[%s1 + $0x8] sm:$0xf]
  %v19 = vld [vmem:[%s1 + $0xc] sm:$0xf]
  %v20 = vld [vmem:[%s1 + $0x10] sm:$0xf]
  %v21 = vld [vmem:[%s1 + $0x14] sm:$0xf]
  %v22 = vld [vmem:[%s1 + $0x18] sm:$0xf]
  %v23 = vld [vmem:[%s1 + $0x1c] sm:$0xf]
  %v24 = vld [vmem:[%s1 + $0x20] sm:$0xf]
  %v25 = vld [vmem:[%s1 + $0x24] sm:$0xf]
  %v26 = vld [vmem:[%s1 + $0x28] sm:$0xf]
  %v27 = vld [vmem:[%s1 + $0x2c] sm:$0xf]
  %v28 = vld [vmem:[%s1 + $0x30] sm:$0xf]
  %v29 = vld [vmem:[%s1 + $0x34] sm:$0xf]
  %v30 = vld [vmem:[%s1 + $0x38] sm:$0xf]
  %v31 = vld [vmem:[%s1 + $0x3c] sm:$0xf]
  %v32 = vld [vmem:[%s1 + $0x40] sm:$0xf]
  %v33 = vld [vmem:[%s1 + $0x44] sm:$0xf]
  %v34 = vld [vmem:[%s1 + $0x48] sm:$0xf]
  %v35 = vld [vmem:[%s1 + $0x4c] sm:$0xf]
  %v36 = vld [vmem:[%s1 + $0x50] sm:$0xf]
  %v37 = vld [vmem:[%s1 + $0x54] sm:$0xf]
  %v38 = vld [vmem:[%s1 + $0x58] sm:$0xf]
  %v39 = vld [vmem:[%s1 + $0x5c] sm:$0xf]
  %v40 = vld [vmem:[%s1 + $0x60] sm:$0xf]
  %v41 = vld [vmem:[%s1 + $0x64] sm:$0xf]
  %v42 = vld [vmem:[%s1 + $0x68] sm:$0xf]
  %v43 = vld [vmem:[%s1 + $0x6c] sm:$0xf]
  %v44 = vld [vmem:[%s1 + $0x70] sm:$0xf]
  %v45 = vld [vmem:[%s1 + $0x74] sm:$0xf]
  %v46 = vld [vmem:[%s1 + $0x78] sm:$0xf]
  %v47 = vld [vmem:[%s1 + $0x7c] sm:$0xf]
  %v48 = vld [vmem:[%s2] sm:$0x1]
  %v50 = vlaneseq
  %v51 = vshrl.u32 %v50, 7
  %v52 = vsub.s32 0, %v51
  %v53 = vrot.slane %v48, %v52
  %v56 = vunpack.c.l.b16 %v15
  %v57 = vunpack.c.h.b16 %v15
  %v58 = vpack.c.b16 %v56, %v56
  %v59 = vpack.c.b16 %v57, %v57
  %v94 = vunpack.c.l.b16 %v16
  %v95 = vunpack.c.l.b16 %v17
  %v96 = vunpack.c.l.b16 %v18
  %v97 = vunpack.c.l.b16 %v19
  %v98 = vunpack.c.l.b16 %v20
  %v99 = vunpack.c.l.b16 %v21
  %v100 = vunpack.c.l.b16 %v22
  %v101 = vunpack.c.l.b16 %v23
  %v102 = vunpack.c.l.b16 %v24
  %v103 = vunpack.c.l.b16 %v25
  %v104 = vunpack.c.l.b16 %v26
  %v105 = vunpack.c.l.b16 %v27
  %v106 = vunpack.c.l.b16 %v28
  %v107 = vunpack.c.l.b16 %v29
  %v108 = vunpack.c.l.b16 %v30
  %v109 = vunpack.c.l.b16 %v31
  %v110 = vunpack.c.l.b16 %v32
  %v111 = vunpack.c.l.b16 %v33
  %v112 = vunpack.c.l.b16 %v34
  %v113 = vunpack.c.l.b16 %v35
  %v114 = vunpack.c.l.b16 %v36
  %v115 = vunpack.c.l.b16 %v37
  %v116 = vunpack.c.l.b16 %v38
  %v117 = vunpack.c.l.b16 %v39
  %v118 = vunpack.c.l.b16 %v40
  %v119 = vunpack.c.l.b16 %v41
  %v120 = vunpack.c.l.b16 %v42
  %v121 = vunpack.c.l.b16 %v43
  %v122 = vunpack.c.l.b16 %v44
  %v123 = vunpack.c.l.b16 %v45
  %v124 = vunpack.c.l.b16 %v46
  %v125 = vunpack.c.l.b16 %v47
  %v126 = vpack.c.b16 %v95, %v94
  %v127 = vpack.c.b16 %v97, %v96
  %v128 = vpack.c.b16 %v99, %v98
  %v129 = vpack.c.b16 %v101, %v100
  %v130 = vpack.c.b16 %v103, %v102
  %v131 = vpack.c.b16 %v105, %v104
  %v132 = vpack.c.b16 %v107, %v106
  %v133 = vpack.c.b16 %v109, %v108
  %v134 = vpack.c.b16 %v111, %v110
  %v135 = vpack.c.b16 %v113, %v112
  %v136 = vpack.c.b16 %v115, %v114
  %v137 = vpack.c.b16 %v117, %v116
  %v138 = vpack.c.b16 %v119, %v118
  %v139 = vpack.c.b16 %v121, %v120
  %v140 = vpack.c.b16 %v123, %v122
  %v141 = vpack.c.b16 %v125, %v124
  %158 = vmatprep.subr.bf16.mxu0 0
  %159 = vmatpush1.bf16.msra.mxu0 %v126
  %160 = vmatprep.subr.bf16.mxu0 0
  %161 = vmatpush1.bf16.msra.mxu0 %v127
  %162 = vmatprep.subr.bf16.mxu0 0
  %163 = vmatpush1.bf16.msra.mxu0 %v128
  %164 = vmatprep.subr.bf16.mxu0 0
  %165 = vmatpush1.bf16.msra.mxu0 %v129
  %166 = vmatprep.subr.bf16.mxu0 0
  %167 = vmatpush1.bf16.msra.mxu0 %v130
  %168 = vmatprep.subr.bf16.mxu0 0
  %169 = vmatpush1.bf16.msra.mxu0 %v131
  %170 = vmatprep.subr.bf16.mxu0 0
  %171 = vmatpush1.bf16.msra.mxu0 %v132
  %172 = vmatprep.subr.bf16.mxu0 0
  %173 = vmatpush1.bf16.msra.mxu0 %v133
  %174 = vmatprep.subr.bf16.mxu0 0
  %175 = vmatpush1.bf16.msra.mxu0 %v134
  %176 = vmatprep.subr.bf16.mxu0 0
  %177 = vmatpush1.bf16.msra.mxu0 %v135
  %178 = vmatprep.subr.bf16.mxu0 0
  %179 = vmatpush1.bf16.msra.mxu0 %v136
  %180 = vmatprep.subr.bf16.mxu0 0
  %181 = vmatpush1.bf16.msra.mxu0 %v137
  %182 = vmatprep.subr.bf16.mxu0 0
  %183 = vmatpush1.bf16.msra.mxu0 %v138
  %184 = vmatprep.subr.bf16.mxu0 0
  %185 = vmatpush1.bf16.msra.mxu0 %v139
  %186 = vmatprep.subr.bf16.mxu0 0
  %187 = vmatpush1.bf16.msra.mxu0 %v140
  %188 = vmatprep.subr.bf16.mxu0 0
  %189 = vmatpush1.bf16.msra.mxu0 %v141
  %190 = vmatprep.mubr.bf16.mxu0 %v59
  %191 = vmatmul.mubr.bf16.gmra.mrb[0].mxu0 %v58
  %v192 = vpop.f32.mrb[0].mxu0
  %v193 = vadd.f32 %v53, %v192
  %v194 = vpop.f32.mrb[0].mxu0
  %v195 = vpop.f32.mrb[0].mxu0
  %v196 = vpop.f32.mrb[0].mxu0
  %197 = vdwg.mxu0
  %198 = vst [vmem:[%s3] sm:$0xff] %v193
  // Predicated region
  $region14: #{_forward.1} parent=0 // pred_check
    _
  $region15: #{_forward.1} parent=0 // pred_check_branch
    %200 = sbr.rel (0) target = $region17
  $region16: #{_forward.1} parent=0 // pred_region
    _
  $region17: #{_forward.1} parent=0 // pred_fallthru
    _
  // Predicated region
  $region18: #{_forward.1} parent=0 // pred_check
    _
  $region19: #{_forward.1} parent=0 // pred_check_branch
    %202 = sbr.rel (0) target = $region21
  $region20: #{_forward.1} parent=0 // pred_region
    _
  $region21: #{_forward.1} parent=0 // pred_fallthru
    _

</llo_original>
